<compile_context>
chip_gen: v6e
topology: v6e:2x2x1
jax: 0.10.0
libtpu: 0.0.40
codegen_flags: <defaults>
</compile_context>

<pallas_src>
import numpy as np
import jax
import jax.numpy as jnp
from jax.experimental import pallas as pl
from jax.experimental.pallas import tpu as pltpu

LANES = 128


def chebyshev_coefficients(order: int) -> np.ndarray:
    """Replicates Chebyshev._init_coefficients (recursion); returns coeff[:, 1:]."""
    coeff = np.zeros((order + 1, order + 1), dtype=np.float32)
    coeff[0, 0] = 1.0
    if order >= 1:
        coeff[1, 1] = 1.0
    for idx in range(2, order + 1):
        coeff[1:, idx] = 2.0 * coeff[:-1, idx - 1]
        coeff[:, idx] -= coeff[:, idx - 2]
    return coeff[:, 1:]  # shape (order+1, order)


def make_cheb_kernel(order: int):
    """Kernel computing T_1..T_order via the 2-op recurrence (no coeff operand)."""

    def kernel(x_ref, o_ref):
        # x_ref: VMEM (TR, 128) input tile (original dtype)
        # o_ref: VMEM (order, TR, 128) output tile (original dtype)
        x = x_ref[...].astype(jnp.float32)
        o_ref[0] = x.astype(o_ref.dtype)          # T_1 = x
        if order >= 2:
            two_x = x + x                          # hoisted: one add, reused each step
            t_prev = jnp.ones_like(x)              # T_0
            t_cur = x                              # T_1
            for k in range(1, order):              # T_{k+1} = 2x*T_k - T_{k-1}
                t_next = two_x * t_cur - t_prev
                t_prev, t_cur = t_cur, t_next
                o_ref[k] = t_cur.astype(o_ref.dtype)

    return kernel


def chebyshev_forward(feat: jax.Array, order: int) -> jax.Array:
    """Pallas implementation of Chebyshev(order).forward(feat)."""
    assert order >= 1, "order must be >= 1 (matches the PyTorch module)"
    orig_shape = feat.shape
    orig_dtype = feat.dtype
    itemsize = jnp.dtype(orig_dtype).itemsize

    flat = jnp.ravel(feat)
    n = flat.shape[0]

    # --- choose the row-tile size TR -------------------------------------------------
    # Double-buffered in + out block bytes per grid step:
    #   2 * (1 + order) * TR * 128 * itemsize
    # Keep that under ~12 MiB so it fits v5e's 16 MiB scoped-VMEM default (and has
    # ample headroom on v6e/v7x) without touching vmem_limit_bytes.
    budget = 12 << 20
    max_tr = budget // (2 * (1 + order) * LANES * itemsize)
    tr_target = max(8, min(2048, (max_tr // 8) * 8))

    rows = -(-n // LANES)                       # ceil(n / 128)
    rows = ((rows + 7) // 8) * 8                # multiple of 8 sublanes
    TR = min(tr_target, rows)
    rows_padded = ((rows + TR - 1) // TR) * TR
    n_pad = rows_padded * LANES

    if n_pad != n:
        flat = jnp.pad(flat, (0, n_pad - n))
    x2d = flat.reshape(rows_padded, LANES)

    grid = (rows_padded // TR,)

    out = pl.pallas_call(
        make_cheb_kernel(order),
        out_shape=jax.ShapeDtypeStruct((order, rows_padded, LANES), orig_dtype),
        grid=grid,
        in_specs=[
            pl.BlockSpec((TR, LANES), lambda i: (i, 0)),            # input tile
        ],
        out_specs=pl.BlockSpec((order, TR, LANES), lambda i: (0, i, 0)),
        compiler_params=pltpu.CompilerParams(
            dimension_semantics=("parallel",)),                     # megacore on v7x
    )(x2d)

    # (order, rows_padded, 128) -> (n_pad, order) -> (*feat.shape, order)
    # TODO(synk): downstream consumers could take the (order, ...)-major layout directly
    # and skip this XLA transpose pass (it is the only extra HBM traffic left).
    out = jnp.transpose(out, (1, 2, 0)).reshape(n_pad, order)[:n]
    return out.reshape(*orig_shape, order)


def chebyshev_reference(feat: np.ndarray, order: int) -> np.ndarray:
    """Pure-numpy reference matching the PyTorch forward."""
    coeff = chebyshev_coefficients(order)                     # (order+1, order)
    powers = feat[..., None] ** np.arange(order + 1)          # (*feat.shape, order+1)
    return powers @ coeff                                      # (*feat.shape, order)


if __name__ == "__main__":
    ORDER = 4
    key = jax.random.PRNGKey(0)
    # NCHW-style input, as a conv-feature map would be
    x = jax.random.uniform(key, (2, 4, 16, 16), jnp.float32, minval=-1.0, maxval=1.0)

    y = chebyshev_forward(x, ORDER)
    y = jax.block_until_ready(y)

    assert y.shape == (2, 4, 16, 16, ORDER), y.shape

    y_ref = chebyshev_reference(np.asarray(x), ORDER)
    np.testing.assert_allclose(np.asarray(y), y_ref, rtol=1e-5, atol=1e-5)

    print("KERNEL_OK")
</pallas_src>

<mosaic_0001>
module attributes {stable_mosaic.version = 11 : i64} {
  func.func @kernel(%arg0: i32, %arg1: memref<16x128xf32, #tpu.memory_space<vmem>>, %arg2: memref<4x16x128xf32, #tpu.memory_space<vmem>>) attributes {dimension_semantics = [#tpu.dimension_semantics<parallel>], iteration_bounds = array<i64: 1>, scalar_prefetch = 0 : i64, scratch_operands = 0 : i64, tpu.core_type = #tpu.core_type<tc>, window_params = [{transform_indices = @transform_0, window_bounds = array<i64: 16, 128>}, {transform_indices = @transform_1, window_bounds = array<i64: 4, 16, 128>}]} {
    %c0 = arith.constant 0 : index
    %c0_0 = arith.constant 0 : index
    %0 = vector.load %arg1[%c0, %c0_0] : memref<16x128xf32, #tpu.memory_space<vmem>>, vector<16x128xf32>
    %c0_1 = arith.constant 0 : index
    %c0_2 = arith.constant 0 : index
    %c0_3 = arith.constant 0 : index
    %1 = vector.load %arg2[%c0_1, %c0_2, %c0_3] : memref<4x16x128xf32, #tpu.memory_space<vmem>>, vector<1x16x128xf32>
    %2 = vector.shape_cast %1 : vector<1x16x128xf32> to vector<16x128xf32>
    %3 = vector.shape_cast %0 : vector<16x128xf32> to vector<1x16x128xf32>
    tpu.vector_store %arg2[%c0_1, %c0_2, %c0_3], %3 {strides = array<i32>} : memref<4x16x128xf32, #tpu.memory_space<vmem>>, vector<1x16x128xf32>,
    %4 = arith.addf %0, %0 : vector<16x128xf32>
    %cst = arith.constant 1.000000e+00 : f32
    %5 = vector.broadcast %cst : f32 to vector<16x128xf32>
    %6 = arith.mulf %4, %0 : vector<16x128xf32>
    %7 = arith.subf %6, %5 : vector<16x128xf32>
    %c1 = arith.constant 1 : index
    %c0_4 = arith.constant 0 : index
    %c0_5 = arith.constant 0 : index
    %8 = vector.load %arg2[%c1, %c0_4, %c0_5] : memref<4x16x128xf32, #tpu.memory_space<vmem>>, vector<1x16x128xf32>
    %9 = vector.shape_cast %8 : vector<1x16x128xf32> to vector<16x128xf32>
    %10 = vector.shape_cast %7 : vector<16x128xf32> to vector<1x16x128xf32>
    tpu.vector_store %arg2[%c1, %c0_4, %c0_5], %10 {strides = array<i32>} : memref<4x16x128xf32, #tpu.memory_space<vmem>>, vector<1x16x128xf32>,
    %11 = arith.mulf %4, %7 : vector<16x128xf32>
    %12 = arith.subf %11, %0 : vector<16x128xf32>
    %c2 = arith.constant 2 : index
    %c0_6 = arith.constant 0 : index
    %c0_7 = arith.constant 0 : index
    %13 = vector.load %arg2[%c2, %c0_6, %c0_7] : memref<4x16x128xf32, #tpu.memory_space<vmem>>, vector<1x16x128xf32>
    %14 = vector.shape_cast %13 : vector<1x16x128xf32> to vector<16x128xf32>
    %15 = vector.shape_cast %12 : vector<16x128xf32> to vector<1x16x128xf32>
    tpu.vector_store %arg2[%c2, %c0_6, %c0_7], %15 {strides = array<i32>} : memref<4x16x128xf32, #tpu.memory_space<vmem>>, vector<1x16x128xf32>,
    %16 = arith.mulf %4, %12 : vector<16x128xf32>
    %17 = arith.subf %16, %7 : vector<16x128xf32>
    %c3 = arith.constant 3 : index
    %c0_8 = arith.constant 0 : index
    %c0_9 = arith.constant 0 : index
    %18 = vector.load %arg2[%c3, %c0_8, %c0_9] : memref<4x16x128xf32, #tpu.memory_space<vmem>>, vector<1x16x128xf32>
    %19 = vector.shape_cast %18 : vector<1x16x128xf32> to vector<16x128xf32>
    %20 = vector.shape_cast %17 : vector<16x128xf32> to vector<1x16x128xf32>
    tpu.vector_store %arg2[%c3, %c0_8, %c0_9], %20 {strides = array<i32>} : memref<4x16x128xf32, #tpu.memory_space<vmem>>, vector<1x16x128xf32>,
    return
  }
  func.func @transform_0(%arg0: i32) -> (i32, i32) {
    %c0_i32 = arith.constant 0 : i32
    %c0_i32_0 = arith.constant 0 : i32
    return %arg0, %c0_i32 : i32, i32
  }
  func.func @transform_1(%arg0: i32) -> (i32, i32, i32) {
    %c0_i32 = arith.constant 0 : i32
    %c0_i32_0 = arith.constant 0 : i32
    %c0_i32_1 = arith.constant 0 : i32
    return %c0_i32, %arg0, %c0_i32_0 : i32, i32, i32
  }
}

</mosaic_0001>

<llo_original>
// kernel: tpu_custom_call.1
$region0: #{tpu_custom_call.1}
  #allocation0 [shape = 'u32[]', space=smem, size = 0x4, offset = 0x4, fixed_abs, tag = 'smem constant byte address 0x4 - core index']
  #allocation1 [shape = 'u32[144,128]{1,0:T(1,128)}', space=vmem, size = 0x12000, scoped, tag = 'internal scratch']
  %s0 = inlined_call_operand.hbm [shape: f32[16,128], index: 0, kind: input, shape index: {}]
  %s1 = inlined_call_operand.hbm [shape: f32[4,16,128], index: 1, kind: output, shape index: {}]
  %s2 = sld [smem:[#allocation0]]
  $region18: #{tpu_custom_call.1} parent=0
    _
  %s4 = ssub.s32 1, %s2
  %s5 = scalar_select 0, %s4, %s2
  $region1: #{tpu_custom_call.1} parent=0
    #allocation2 [shape = 'u8[8192]{0}', space=vmem, size = 0x2000, scoped, tag = 'input window, operand 0, single buffered']
    #allocation3 [shape = 's32[1]{0}', space=sflag, size = 0x4, scoped, tag = 'scoped memory for tpu_custom_call.1']
    #allocation4 [shape = 's32[1]{0}', space=sflag, size = 0x4, scoped, tag = 'scoped memory for tpu_custom_call.1']
    #allocation5 [shape = 'u8[32768]{0}', space=vmem, size = 0x8000, scoped, tag = 'output window, operand 0, single buffered']
    %6 = vsyncpa [#allocation3], 0
    %7 = vsyncpa [#allocation4], 0
    // Predicated region
    $region2: #{tpu_custom_call.1} parent=1 // pred_check
      _
    $region3: #{tpu_custom_call.1} parent=1 // pred_check_branch
      %9 = sbr.rel (0) target = $region5
    $region4: #{tpu_custom_call.1} parent=1 // pred_region
      %s11 = ssub.s32 256, 256
      %12 = vsyncadd [#allocation3], %s11
      %s13 = sshll.u32 [#allocation2], 4
      %s14 = int_to_ptr.vmem [resolvable:$true] %s13
      %19 = dma.hbm_to_vmem [thread:$0]  %s0, 256, %s14, [#allocation3], 128, 128, 8
    $region5: #{tpu_custom_call.1} parent=1 // pred_fallthru
      _
    // Predicated region
    $region6: #{tpu_custom_call.1} parent=1 // pred_check
      _
    $region7: #{tpu_custom_call.1} parent=1 // pred_check_branch
      %21 = sbr.rel (0) target = $region9
    $region8: #{tpu_custom_call.1} parent=1 // pred_region
      %22 = dma.done [#allocation3], 256
    $region9: #{tpu_custom_call.1} parent=1 // pred_fallthru
      _
    %v23 = vld [vmem:[#allocation2] sm:$0xff]
    %v24 = vld [vmem:[#allocation2 + $0x8] sm:$0xff]
    %25 = vst [vmem:[#allocation5] sm:$0xff] %v23
    %26 = vst [vmem:[#allocation5 + $0x8] sm:$0xff] %v24
    %v27 = vadd.f32 %v23, %v23
    %v28 = vadd.f32 %v24, %v24
    %v29 = vmul.f32 %v27, %v23
    %v30 = vmul.f32 %v28, %v24
    %v31 = vsub.f32 %v29, 1.0
    %v32 = vsub.f32 %v30, 1.0
    %s33 = scalar_lea.vmem [#allocation5], 16
    %34 = vst [vmem:[%s33] sm:$0xff] %v31
    %35 = vst [vmem:[%s33 + $0x8] sm:$0xff] %v32
    %v36 = vmul.f32 %v27, %v31
    %v37 = vmul.f32 %v28, %v32
    %v38 = vsub.f32 %v36, %v23
    %v39 = vsub.f32 %v37, %v24
    %s40 = scalar_lea.vmem [#allocation5], 32
    %41 = vst [vmem:[%s40] sm:$0xff] %v38
    %42 = vst [vmem:[%s40 + $0x8] sm:$0xff] %v39
    %v43 = vmul.f32 %v27, %v38
    %v44 = vmul.f32 %v28, %v39
    %v45 = vsub.f32 %v43, %v31
    %v46 = vsub.f32 %v44, %v32
    %s47 = scalar_lea.vmem [#allocation5], 48
    %48 = vst [vmem:[%s47] sm:$0xff] %v45
    %49 = vst [vmem:[%s47 + $0x8] sm:$0xff] %v46
    // Predicated region
    $region10: #{tpu_custom_call.1} parent=1 // pred_check
      _
    $region11: #{tpu_custom_call.1} parent=1 // pred_check_branch
      %51 = sbr.rel (0) target = $region13
    $region12: #{tpu_custom_call.1} parent=1 // pred_region
      %s53 = ssub.s32 1024, 1024
      %54 = vsyncadd [#allocation4], %s53
      %s55 = sshll.u32 [#allocation5], 4
      %s56 = int_to_ptr.vmem [resolvable:$true] %s55
      %61 = dma.vmem_to_hbm [thread:$0]  %s56, 1024, %s1, [#allocation4], 128, 128, 8
    $region13: #{tpu_custom_call.1} parent=1 // pred_fallthru
      _
    // Predicated region
    $region14: #{tpu_custom_call.1} parent=1 // pred_check
      _
    $region15: #{tpu_custom_call.1} parent=1 // pred_check_branch
      %63 = sbr.rel (0) target = $region17
    $region16: #{tpu_custom_call.1} parent=1 // pred_region
      %64 = dma.done [#allocation4], 1024
    $region17: #{tpu_custom_call.1} parent=1 // pred_fallthru
      _
    %65 = vsyncpa [#allocation3], 1
    %66 = vsyncpa [#allocation4], 1

</llo_original>
